<compile_context>
chip_gen: v5e
topology: v5e:2x2
jax: 0.10.0
libtpu: 0.0.40
codegen_flags: <defaults>
</compile_context>

<pallas_src>
import functools

import jax
import jax.numpy as jnp
from jax.experimental import pallas as pl
from jax.experimental.pallas import tpu as pltpu


# --------------------------------------------------------------------------
# Kernel 1: hoisted input projection  xp = x @ Wx + b   (time-parallel part)
# --------------------------------------------------------------------------
def _input_proj_kernel(x_ref, wx_ref, b_ref, out_ref):
    # x_ref: (TM, I) row tile, wx_ref: (I, 2H), b_ref: (1, 2H), out_ref: (TM, 2H)
    out_ref[...] = (
        jnp.dot(x_ref[...], wx_ref[...], preferred_element_type=jnp.float32)
        + b_ref[...]
    ).astype(out_ref.dtype)


# --------------------------------------------------------------------------
# Kernel 2: sequential minGRU recurrence over (batch-block, time-chunk) tiles
# --------------------------------------------------------------------------
def _mingru_scan_kernel(xp_ref, h0_ref, wh_ref, out_ref, h_scratch):
    """xp_ref : (BB, TC, 2H) f32  pre-projected inputs  x_t @ Wx + b
       h0_ref : (BB, H)           initial hidden state
       wh_ref : (H, 2H)           fused recurrent weight [Whz | Who]
       out_ref: (BB, TC, H)       hidden state after every step
       h_scratch: (BB, H) f32     carry across time chunks (grid axis 1)
    """
    tc = xp_ref.shape[1]
    hidden = wh_ref.shape[0]

    @pl.when(pl.program_id(1) == 0)          # first time-chunk of this batch block
    def _():
        h_scratch[...] = h0_ref[...].astype(jnp.float32)

    h = h_scratch[...]                        # (BB, H) f32 carry
    wh = wh_ref[...]                          # (H, 2H), loaded once per chunk

    # Static unroll: only the h @ Wh matmul is serially dependent; the x-part
    # was precomputed, so each step is one MXU matmul + a short VPU/EUP tail.
    for s in range(tc):
        hp = jnp.dot(h.astype(wh.dtype), wh, preferred_element_type=jnp.float32)
        lin = xp_ref[:, s, :] + hp            # (BB, 2H)
        z = jax.nn.sigmoid(lin[:, :hidden])
        h_tilde = jnp.tanh(lin[:, hidden:])
        h = h + z * (h_tilde - h)             # == (1 - z) * h + z * h_tilde
        out_ref[:, s, :] = h.astype(out_ref.dtype)

    h_scratch[...] = h


# --------------------------------------------------------------------------
# Wrapper
# --------------------------------------------------------------------------
@functools.partial(jax.jit, static_argnames=("time_chunk", "matmul_dtype"))
def mingru_layer(x, params, hidden=None, *, time_chunk=32, matmul_dtype=None):
    """x: (B, T, I) batch-first (MinGRULayer(batch_first=True)).

    Returns (outputs, hidden) == ((B, T, H), (B, H)).
    """
    B, T, I = x.shape
    wx, wh, b = params["wx"], params["wh"], params["b"]
    H = wh.shape[0]

    if hidden is None:
        hidden = jnp.zeros((B, H), dtype=x.dtype)

    # ---- time chunking (amortize per-grid-step overhead) -------------------
    if T <= time_chunk:
        tc = T
        t_pad = T
    else:
        tc = max(8, (time_chunk // 8) * 8)    # keep chunk sublane-aligned
        t_pad = ((T + tc - 1) // tc) * tc
    x_p = x if t_pad == T else jnp.pad(x, ((0, 0), (0, t_pad - T), (0, 0)))

    # ---- batch blocking: lets multi-TensorCore chips split the batch -------
    bb = B // 2 if (B >= 16 and B % 16 == 0) else B

    # Optional bf16 matmul operands (v6e/v7x); carry + nonlinearities stay f32.
    if matmul_dtype is not None:
        x_p = x_p.astype(matmul_dtype)
        wx = wx.astype(matmul_dtype)
        wh = wh.astype(matmul_dtype)

    # ---- 1) hoisted input projection: one big (B*T, I) @ (I, 2H) matmul ----
    M = B * t_pad
    xf = x_p.reshape(M, I)                    # contiguous merge, no data movement
    tm = M if M <= 1024 else 1024
    xp = pl.pallas_call(
        _input_proj_kernel,
        out_shape=jax.ShapeDtypeStruct((M, 2 * H), jnp.float32),
        grid_spec=pltpu.PrefetchScalarGridSpec(
            num_scalar_prefetch=0,
            grid=(pl.cdiv(M, tm),),
            in_specs=[
                pl.BlockSpec((tm, I), lambda m: (m, 0)),       # x rows
                pl.BlockSpec((I, 2 * H), lambda m: (0, 0)),    # Wx (constant block)
                pl.BlockSpec((1, 2 * H), lambda m: (0, 0)),    # bias
            ],
            out_specs=pl.BlockSpec((tm, 2 * H), lambda m: (m, 0)),
        ),
        compiler_params=pltpu.CompilerParams(
            dimension_semantics=("parallel",),
        ),
    )(xf, wx, b)
    xp = xp.reshape(B, t_pad, 2 * H)

    # ---- 2) sequential recurrence: only h @ Wh on the critical path --------
    # NOTE: for very large H, give the weight spec pipeline_mode=pl.Buffered(1)
    # (or DMA it once into scratch) and set vmem_limit_bytes explicitly;
    # unnecessary at these sizes.
    outputs_full = pl.pallas_call(
        _mingru_scan_kernel,
        out_shape=jax.ShapeDtypeStruct((B, t_pad, H), x.dtype),
        grid_spec=pltpu.PrefetchScalarGridSpec(
            num_scalar_prefetch=0,
            grid=(B // bb, t_pad // tc),
            in_specs=[
                pl.BlockSpec((bb, tc, 2 * H), lambda bi, ci: (bi, ci, 0)),  # xp chunk
                pl.BlockSpec((bb, H), lambda bi, ci: (bi, 0)),              # h0
                pl.BlockSpec((H, 2 * H), lambda bi, ci: (0, 0)),            # Wh
            ],
            out_specs=pl.BlockSpec((bb, tc, H), lambda bi, ci: (bi, ci, 0)),
            scratch_shapes=[pltpu.VMEM((bb, H), jnp.float32)],              # carry
        ),
        compiler_params=pltpu.CompilerParams(
            dimension_semantics=("parallel", "arbitrary"),  # batch || , time serial
        ),
    )(xp, hidden, wh)

    outputs = outputs_full[:, :T, :]          # drop padded timesteps
    return outputs, outputs[:, -1, :]         # final hidden == last output


# --------------------------------------------------------------------------
# Parameter init (xavier_uniform weights, zero bias, fused gate layout)
# --------------------------------------------------------------------------
def init_params(key, input_size, hidden_size, dtype=jnp.float32):
    kz, ko = jax.random.split(key, 2)
    fan_in = input_size + hidden_size
    fan_out = hidden_size
    bound = (6.0 / (fan_in + fan_out)) ** 0.5
    # torch Linear weight is (out, in) = (H, I+H)
    wz = jax.random.uniform(kz, (fan_out, fan_in), dtype, -bound, bound)
    wo = jax.random.uniform(ko, (fan_out, fan_in), dtype, -bound, bound)
    # split the concat weight into input / hidden parts and fuse the two gates
    wx = jnp.concatenate([wz[:, :input_size].T, wo[:, :input_size].T], axis=1)  # (I, 2H)
    wh = jnp.concatenate([wz[:, input_size:].T, wo[:, input_size:].T], axis=1)  # (H, 2H)
    b = jnp.zeros((1, 2 * hidden_size), dtype)
    return {"wx": wx, "wh": wh, "b": b}


# --------------------------------------------------------------------------
# Pure-JAX reference of the PyTorch forward (for correctness checking)
# --------------------------------------------------------------------------
def _reference(x, params, hidden=None):
    B, T, I = x.shape
    wx, wh, b = params["wx"], params["wh"], params["b"]
    H = wh.shape[0]
    h = jnp.zeros((B, H), x.dtype) if hidden is None else hidden
    outs = []
    for t in range(T):
        lin = (x[:, t, :] @ wx + b) + h @ wh
        z = jax.nn.sigmoid(lin[:, :H])
        h_tilde = jnp.tanh(lin[:, H:])
        h = (1.0 - z) * h + z * h_tilde
        outs.append(h)
    return jnp.stack(outs, axis=1), h


if __name__ == "__main__":
    key = jax.random.PRNGKey(0)
    k_x, k_p, k_x2, k_p2 = jax.random.split(key, 4)

    # Small shapes consistent with the module: batch=2, seq=8, input=16, hidden=32.
    B, T, I, H = 2, 8, 16, 32
    x = jax.random.normal(k_x, (B, T, I), dtype=jnp.float32)
    params = init_params(k_p, I, H)

    outputs, h_last = mingru_layer(x, params)
    jax.block_until_ready((outputs, h_last))

    ref_out, ref_h = _reference(x, params)
    assert outputs.shape == (B, T, H) and h_last.shape == (B, H)
    assert jnp.allclose(outputs, ref_out, atol=1e-4, rtol=1e-4)
    assert jnp.allclose(h_last, ref_h, atol=1e-4, rtol=1e-4)

    # Second config: exercises time-chunking + padding + batch blocking.
    B2, T2, I2, H2 = 16, 40, 64, 128
    x2 = jax.random.normal(k_x2, (B2, T2, I2), dtype=jnp.float32)
    params2 = init_params(k_p2, I2, H2)
    out2, h2 = mingru_layer(x2, params2, time_chunk=16)
    jax.block_until_ready((out2, h2))

    ref_out2, ref_h2 = _reference(x2, params2)
    assert out2.shape == (B2, T2, H2) and h2.shape == (B2, H2)
    assert jnp.allclose(out2, ref_out2, atol=5e-4, rtol=5e-4)
    assert jnp.allclose(h2, ref_h2, atol=5e-4, rtol=5e-4)

    print("KERNEL_OK")
</pallas_src>

<mosaic_0001>
module attributes {stable_mosaic.version = 11 : i64} {
  func.func @_input_proj_kernel(%arg0: i32, %arg1: memref<16x16xf32, #tpu.memory_space<vmem>>, %arg2: memref<16x64xf32, #tpu.memory_space<vmem>>, %arg3: memref<1x64xf32, #tpu.memory_space<vmem>>, %arg4: memref<16x64xf32, #tpu.memory_space<vmem>>) attributes {dimension_semantics = [#tpu.dimension_semantics<parallel>], iteration_bounds = array<i64: 1>, scalar_prefetch = 0 : i64, scratch_operands = 0 : i64, tpu.core_type = #tpu.core_type<tc>, window_params = [{transform_indices = @transform_0, window_bounds = array<i64: 16, 16>}, {pipeline_mode = #tpu.pipeline_mode<synchronous>, transform_indices = @transform_1, window_bounds = array<i64: 16, 64>}, {pipeline_mode = #tpu.pipeline_mode<synchronous>, transform_indices = @transform_2, window_bounds = array<i64: 1, 64>}, {transform_indices = @transform_3, window_bounds = array<i64: 16, 64>}]} {
    %c0 = arith.constant 0 : index
    %c0_0 = arith.constant 0 : index
    %0 = vector.load %arg1[%c0, %c0_0] : memref<16x16xf32, #tpu.memory_space<vmem>>, vector<16x16xf32>
    %c0_1 = arith.constant 0 : index
    %c0_2 = arith.constant 0 : index
    %1 = vector.load %arg2[%c0_1, %c0_2] : memref<16x64xf32, #tpu.memory_space<vmem>>, vector<16x64xf32>
    %cst = arith.constant dense<0.000000e+00> : vector<16x64xf32>
    %2 = tpu.matmul %0, %1, %cst {dimension_numbers = #tpu.dot_dimension_numbers<[1], [0], [0], [1], [0, 0, 1, 1], [], []>} : vector<16x16xf32>, vector<16x64xf32>, vector<16x64xf32> -> vector<16x64xf32>
    %c0_3 = arith.constant 0 : index
    %c0_4 = arith.constant 0 : index
    %3 = vector.load %arg3[%c0_3, %c0_4] : memref<1x64xf32, #tpu.memory_space<vmem>>, vector<1x64xf32>
    %4 = vector.broadcast %3 : vector<1x64xf32> to vector<16x64xf32>
    %5 = arith.addf %2, %4 : vector<16x64xf32>
    %c0_5 = arith.constant 0 : index
    %c0_6 = arith.constant 0 : index
    %6 = vector.load %arg4[%c0_5, %c0_6] : memref<16x64xf32, #tpu.memory_space<vmem>>, vector<16x64xf32>
    tpu.vector_store %arg4[%c0_5, %c0_6], %5 {strides = array<i32>} : memref<16x64xf32, #tpu.memory_space<vmem>>, vector<16x64xf32>,
    return
  }
  func.func @transform_0(%arg0: i32) -> (i32, i32) {
    %c0_i32 = arith.constant 0 : i32
    %c0_i32_0 = arith.constant 0 : i32
    return %arg0, %c0_i32 : i32, i32
  }
  func.func @transform_1(%arg0: i32) -> (i32, i32) {
    %c0_i32 = arith.constant 0 : i32
    %c0_i32_0 = arith.constant 0 : i32
    %c0_i32_1 = arith.constant 0 : i32
    return %c0_i32, %c0_i32_0 : i32, i32
  }
  func.func @transform_2(%arg0: i32) -> (i32, i32) {
    %c0_i32 = arith.constant 0 : i32
    %c0_i32_0 = arith.constant 0 : i32
    %c0_i32_1 = arith.constant 0 : i32
    return %c0_i32, %c0_i32_0 : i32, i32
  }
  func.func @transform_3(%arg0: i32) -> (i32, i32) {
    %c0_i32 = arith.constant 0 : i32
    %c0_i32_0 = arith.constant 0 : i32
    return %arg0, %c0_i32 : i32, i32
  }
}

module attributes {stable_mosaic.version = 11 : i64} {
  func.func @_mingru_scan_kernel(%arg0: i32, %arg1: i32, %arg2: memref<2x8x64xf32, #tpu.memory_space<vmem>>, %arg3: memref<2x32xf32, #tpu.memory_space<vmem>>, %arg4: memref<32x64xf32, #tpu.memory_space<vmem>>, %arg5: memref<2x8x32xf32, #tpu.memory_space<vmem>>, %arg6: memref<2x32xf32, #tpu.memory_space<vmem>>) attributes {dimension_semantics = [#tpu.dimension_semantics<parallel>, #tpu.dimension_semantics<arbitrary>], iteration_bounds = array<i64: 1, 1>, scalar_prefetch = 0 : i64, scratch_operands = 1 : i64, tpu.core_type = #tpu.core_type<tc>, window_params = [{transform_indices = @transform_0, window_bounds = array<i64: 2, 8, 64>}, {transform_indices = @transform_1, window_bounds = array<i64: 2, 32>}, {pipeline_mode = #tpu.pipeline_mode<synchronous>, transform_indices = @transform_2, window_bounds = array<i64: 32, 64>}, {transform_indices = @transform_3, window_bounds = array<i64: 2, 8, 32>}]} {
    %c0_i32 = arith.constant 0 : i32
    %0 = arith.cmpi eq, %arg1, %c0_i32 : i32
    %1 = arith.extui %0 : i1 to i32
    %c0_i32_0 = arith.constant 0 : i32
    %2 = arith.cmpi ne, %1, %c0_i32_0 : i32
    scf.if %2 {
      %c0_62 = arith.constant 0 : index
      %c0_63 = arith.constant 0 : index
      %150 = vector.load %arg3[%c0_62, %c0_63] : memref<2x32xf32, #tpu.memory_space<vmem>>, vector<2x32xf32>
      %c0_64 = arith.constant 0 : index
      %c0_65 = arith.constant 0 : index
      %151 = vector.load %arg6[%c0_64, %c0_65] : memref<2x32xf32, #tpu.memory_space<vmem>>, vector<2x32xf32>
      tpu.vector_store %arg6[%c0_64, %c0_65], %150 {strides = array<i32>} : memref<2x32xf32, #tpu.memory_space<vmem>>, vector<2x32xf32>,
    } else {
    }
    %c0 = arith.constant 0 : index
    %c0_1 = arith.constant 0 : index
    %3 = vector.load %arg6[%c0, %c0_1] : memref<2x32xf32, #tpu.memory_space<vmem>>, vector<2x32xf32>
    %c0_2 = arith.constant 0 : index
    %c0_3 = arith.constant 0 : index
    %4 = vector.load %arg4[%c0_2, %c0_3] : memref<32x64xf32, #tpu.memory_space<vmem>>, vector<32x64xf32>
    %cst = arith.constant dense<0.000000e+00> : vector<2x64xf32>
    %5 = tpu.matmul %3, %4, %cst {dimension_numbers = #tpu.dot_dimension_numbers<[1], [0], [0], [1], [0, 0, 1, 1], [], []>} : vector<2x32xf32>, vector<32x64xf32>, vector<2x64xf32> -> vector<2x64xf32>
    %c0_4 = arith.constant 0 : index
    %c0_5 = arith.constant 0 : index
    %c0_6 = arith.constant 0 : index
    %6 = vector.load %arg2[%c0_4, %c0_5, %c0_6] : memref<2x8x64xf32, #tpu.memory_space<vmem>>, vector<2x1x64xf32>
    %7 = vector.shape_cast %6 : vector<2x1x64xf32> to vector<2x64xf32>
    %8 = arith.addf %7, %5 : vector<2x64xf32>
    %9 = vector.extract_strided_slice %8 {offsets = [0, 0], sizes = [2, 32], strides = [1, 1]} : vector<2x64xf32> to vector<2x32xf32>
    %10 = arith.negf %9 : vector<2x32xf32>
    %11 = math.exp %10 : vector<2x32xf32>
    %cst_7 = arith.constant 1.000000e+00 : f32
    %12 = vector.broadcast %cst_7 : f32 to vector<2x32xf32>
    %13 = arith.addf %12, %11 : vector<2x32xf32>
    %14 = arith.divf %12, %13 : vector<2x32xf32>
    %15 = vector.extract_strided_slice %8 {offsets = [0, 32], sizes = [2, 32], strides = [1, 1]} : vector<2x64xf32> to vector<2x32xf32>
    %16 = math.tanh %15 : vector<2x32xf32>
    %17 = arith.subf %16, %3 : vector<2x32xf32>
    %18 = arith.mulf %14, %17 : vector<2x32xf32>
    %19 = arith.addf %3, %18 : vector<2x32xf32>
    %c0_8 = arith.constant 0 : index
    %c0_9 = arith.constant 0 : index
    %c0_10 = arith.constant 0 : index
    %20 = vector.load %arg5[%c0_8, %c0_9, %c0_10] : memref<2x8x32xf32, #tpu.memory_space<vmem>>, vector<2x1x32xf32>
    %21 = vector.shape_cast %20 : vector<2x1x32xf32> to vector<2x32xf32>
    %22 = vector.shape_cast %19 : vector<2x32xf32> to vector<2x1x32xf32>
    tpu.vector_store %arg5[%c0_8, %c0_9, %c0_10], %22 {strides = array<i32>} : memref<2x8x32xf32, #tpu.memory_space<vmem>>, vector<2x1x32xf32>,
    %cst_11 = arith.constant dense<0.000000e+00> : vector<2x64xf32>
    %23 = tpu.matmul %19, %4, %cst_11 {dimension_numbers = #tpu.dot_dimension_numbers<[1], [0], [0], [1], [0, 0, 1, 1], [], []>} : vector<2x32xf32>, vector<32x64xf32>, vector<2x64xf32> -> vector<2x64xf32>
    %c0_12 = arith.constant 0 : index
    %c1 = arith.constant 1 : index
    %c0_13 = arith.constant 0 : index
    %24 = vector.load %arg2[%c0_12, %c1, %c0_13] : memref<2x8x64xf32, #tpu.memory_space<vmem>>, vector<2x1x64xf32>
    %25 = vector.shape_cast %24 : vector<2x1x64xf32> to vector<2x64xf32>
    %26 = arith.addf %25, %23 : vector<2x64xf32>
    %27 = vector.extract_strided_slice %26 {offsets = [0, 0], sizes = [2, 32], strides = [1, 1]} : vector<2x64xf32> to vector<2x32xf32>
    %28 = arith.negf %27 : vector<2x32xf32>
    %29 = math.exp %28 : vector<2x32xf32>
    %cst_14 = arith.constant 1.000000e+00 : f32
    %30 = vector.broadcast %cst_14 : f32 to vector<2x32xf32>
    %31 = arith.addf %30, %29 : vector<2x32xf32>
    %32 = arith.divf %30, %31 : vector<2x32xf32>
    %33 = vector.extract_strided_slice %26 {offsets = [0, 32], sizes = [2, 32], strides = [1, 1]} : vector<2x64xf32> to vector<2x32xf32>
    %34 = math.tanh %33 : vector<2x32xf32>
    %35 = arith.subf %34, %19 : vector<2x32xf32>
    %36 = arith.mulf %32, %35 : vector<2x32xf32>
    %37 = arith.addf %19, %36 : vector<2x32xf32>
    %c0_15 = arith.constant 0 : index
    %c1_16 = arith.constant 1 : index
    %c0_17 = arith.constant 0 : index
    %38 = vector.load %arg5[%c0_15, %c1_16, %c0_17] : memref<2x8x32xf32, #tpu.memory_space<vmem>>, vector<2x1x32xf32>
    %39 = vector.shape_cast %38 : vector<2x1x32xf32> to vector<2x32xf32>
    %40 = vector.shape_cast %37 : vector<2x32xf32> to vector<2x1x32xf32>
    tpu.vector_store %arg5[%c0_15, %c1_16, %c0_17], %40 {strides = array<i32>} : memref<2x8x32xf32, #tpu.memory_space<vmem>>, vector<2x1x32xf32>,
    %cst_18 = arith.constant dense<0.000000e+00> : vector<2x64xf32>
    %41 = tpu.matmul %37, %4, %cst_18 {dimension_numbers = #tpu.dot_dimension_numbers<[1], [0], [0], [1], [0, 0, 1, 1], [], []>} : vector<2x32xf32>, vector<32x64xf32>, vector<2x64xf32> -> vector<2x64xf32>
    %c0_19 = arith.constant 0 : index
    %c2 = arith.constant 2 : index
    %c0_20 = arith.constant 0 : index
    %42 = vector.load %arg2[%c0_19, %c2, %c0_20] : memref<2x8x64xf32, #tpu.memory_space<vmem>>, vector<2x1x64xf32>
    %43 = vector.shape_cast %42 : vector<2x1x64xf32> to vector<2x64xf32>
    %44 = arith.addf %43, %41 : vector<2x64xf32>
    %45 = vector.extract_strided_slice %44 {offsets = [0, 0], sizes = [2, 32], strides = [1, 1]} : vector<2x64xf32> to vector<2x32xf32>
    %46 = arith.negf %45 : vector<2x32xf32>
    %47 = math.exp %46 : vector<2x32xf32>
    %cst_21 = arith.constant 1.000000e+00 : f32
    %48 = vector.broadcast %cst_21 : f32 to vector<2x32xf32>
    %49 = arith.addf %48, %47 : vector<2x32xf32>
    %50 = arith.divf %48, %49 : vector<2x32xf32>
    %51 = vector.extract_strided_slice %44 {offsets = [0, 32], sizes = [2, 32], strides = [1, 1]} : vector<2x64xf32> to vector<2x32xf32>
    %52 = math.tanh %51 : vector<2x32xf32>
    %53 = arith.subf %52, %37 : vector<2x32xf32>
    %54 = arith.mulf %50, %53 : vector<2x32xf32>
    %55 = arith.addf %37, %54 : vector<2x32xf32>
    %c0_22 = arith.constant 0 : index
    %c2_23 = arith.constant 2 : index
    %c0_24 = arith.constant 0 : index
    %56 = vector.load %arg5[%c0_22, %c2_23, %c0_24] : memref<2x8x32xf32, #tpu.memory_space<vmem>>, vector<2x1x32xf32>
    %57 = vector.shape_cast %56 : vector<2x1x32xf32> to vector<2x32xf32>
    %58 = vector.shape_cast %55 : vector<2x32xf32> to vector<2x1x32xf32>
    tpu.vector_store %arg5[%c0_22, %c2_23, %c0_24], %58 {strides = array<i32>} : memref<2x8x32xf32, #tpu.memory_space<vmem>>, vector<2x1x32xf32>,
    %cst_25 = arith.constant dense<0.000000e+00> : vector<2x64xf32>
    %59 = tpu.matmul %55, %4, %cst_25 {dimension_numbers = #tpu.dot_dimension_numbers<[1], [0], [0], [1], [0, 0, 1, 1], [], []>} : vector<2x32xf32>, vector<32x64xf32>, vector<2x64xf32> -> vector<2x64xf32>
    %c0_26 = arith.constant 0 : index
    %c3 = arith.constant 3 : index
    %c0_27 = arith.constant 0 : index
    %60 = vector.load %arg2[%c0_26, %c3, %c0_27] : memref<2x8x64xf32, #tpu.memory_space<vmem>>, vector<2x1x64xf32>
    %61 = vector.shape_cast %60 : vector<2x1x64xf32> to vector<2x64xf32>
    %62 = arith.addf %61, %59 : vector<2x64xf32>
    %63 = vector.extract_strided_slice %62 {offsets = [0, 0], sizes = [2, 32], strides = [1, 1]} : vector<2x64xf32> to vector<2x32xf32>
    %64 = arith.negf %63 : vector<2x32xf32>
    %65 = math.exp %64 : vector<2x32xf32>
    %cst_28 = arith.constant 1.000000e+00 : f32
    %66 = vector.broadcast %cst_28 : f32 to vector<2x32xf32>
    %67 = arith.addf %66, %65 : vector<2x32xf32>
    %68 = arith.divf %66, %67 : vector<2x32xf32>
    %69 = vector.extract_strided_slice %62 {offsets = [0, 32], sizes = [2, 32], strides = [1, 1]} : vector<2x64xf32> to vector<2x32xf32>
    %70 = math.tanh %69 : vector<2x32xf32>
    %71 = arith.subf %70, %55 : vector<2x32xf32>
    %72 = arith.mulf %68, %71 : vector<2x32xf32>
    %73 = arith.addf %55, %72 : vector<2x32xf32>
    %c0_29 = arith.constant 0 : index
    %c3_30 = arith.constant 3 : index
    %c0_31 = arith.constant 0 : index
    %74 = vector.load %arg5[%c0_29, %c3_30, %c0_31] : memref<2x8x32xf32, #tpu.memory_space<vmem>>, vector<2x1x32xf32>
    %75 = vector.shape_cast %74 : vector<2x1x32xf32> to vector<2x32xf32>
    %76 = vector.shape_cast %73 : vector<2x32xf32> to vector<2x1x32xf32>
    tpu.vector_store %arg5[%c0_29, %c3_30, %c0_31], %76 {strides = array<i32>} : memref<2x8x32xf32, #tpu.memory_space<vmem>>, vector<2x1x32xf32>,
    %cst_32 = arith.constant dense<0.000000e+00> : vector<2x64xf32>
    %77 = tpu.matmul %73, %4, %cst_32 {dimension_numbers = #tpu.dot_dimension_numbers<[1], [0], [0], [1], [0, 0, 1, 1], [], []>} : vector<2x32xf32>, vector<32x64xf32>, vector<2x64xf32> -> vector<2x64xf32>
    %c0_33 = arith.constant 0 : index
    %c4 = arith.constant 4 : index
    %c0_34 = arith.constant 0 : index
    %78 = vector.load %arg2[%c0_33, %c4, %c0_34] : memref<2x8x64xf32, #tpu.memory_space<vmem>>, vector<2x1x64xf32>
    %79 = vector.shape_cast %78 : vector<2x1x64xf32> to vector<2x64xf32>
    %80 = arith.addf %79, %77 : vector<2x64xf32>
    %81 = vector.extract_strided_slice %80 {offsets = [0, 0], sizes = [2, 32], strides = [1, 1]} : vector<2x64xf32> to vector<2x32xf32>
    %82 = arith.negf %81 : vector<2x32xf32>
    %83 = math.exp %82 : vector<2x32xf32>
    %cst_35 = arith.constant 1.000000e+00 : f32
    %84 = vector.broadcast %cst_35 : f32 to vector<2x32xf32>
    %85 = arith.addf %84, %83 : vector<2x32xf32>
    %86 = arith.divf %84, %85 : vector<2x32xf32>
    %87 = vector.extract_strided_slice %80 {offsets = [0, 32], sizes = [2, 32], strides = [1, 1]} : vector<2x64xf32> to vector<2x32xf32>
    %88 = math.tanh %87 : vector<2x32xf32>
    %89 = arith.subf %88, %73 : vector<2x32xf32>
    %90 = arith.mulf %86, %89 : vector<2x32xf32>
    %91 = arith.addf %73, %90 : vector<2x32xf32>
    %c0_36 = arith.constant 0 : index
    %c4_37 = arith.constant 4 : index
    %c0_38 = arith.constant 0 : index
    %92 = vector.load %arg5[%c0_36, %c4_37, %c0_38] : memref<2x8x32xf32, #tpu.memory_space<vmem>>, vector<2x1x32xf32>
    %93 = vector.shape_cast %92 : vector<2x1x32xf32> to vector<2x32xf32>
    %94 = vector.shape_cast %91 : vector<2x32xf32> to vector<2x1x32xf32>
    tpu.vector_store %arg5[%c0_36, %c4_37, %c0_38], %94 {strides = array<i32>} : memref<2x8x32xf32, #tpu.memory_space<vmem>>, vector<2x1x32xf32>,
    %cst_39 = arith.constant dense<0.000000e+00> : vector<2x64xf32>
    %95 = tpu.matmul %91, %4, %cst_39 {dimension_numbers = #tpu.dot_dimension_numbers<[1], [0], [0], [1], [0, 0, 1, 1], [], []>} : vector<2x32xf32>, vector<32x64xf32>, vector<2x64xf32> -> vector<2x64xf32>
    %c0_40 = arith.constant 0 : index
    %c5 = arith.constant 5 : index
    %c0_41 = arith.constant 0 : index
    %96 = vector.load %arg2[%c0_40, %c5, %c0_41] : memref<2x8x64xf32, #tpu.memory_space<vmem>>, vector<2x1x64xf32>
    %97 = vector.shape_cast %96 : vector<2x1x64xf32> to vector<2x64xf32>
    %98 = arith.addf %97, %95 : vector<2x64xf32>
    %99 = vector.extract_strided_slice %98 {offsets = [0, 0], sizes = [2, 32], strides = [1, 1]} : vector<2x64xf32> to vector<2x32xf32>
    %100 = arith.negf %99 : vector<2x32xf32>
    %101 = math.exp %100 : vector<2x32xf32>
    %cst_42 = arith.constant 1.000000e+00 : f32
    %102 = vector.broadcast %cst_42 : f32 to vector<2x32xf32>
    %103 = arith.addf %102, %101 : vector<2x32xf32>
    %104 = arith.divf %102, %103 : vector<2x32xf32>
    %105 = vector.extract_strided_slice %98 {offsets = [0, 32], sizes = [2, 32], strides = [1, 1]} : vector<2x64xf32> to vector<2x32xf32>
    %106 = math.tanh %105 : vector<2x32xf32>
    %107 = arith.subf %106, %91 : vector<2x32xf32>
    %108 = arith.mulf %104, %107 : vector<2x32xf32>
    %109 = arith.addf %91, %108 : vector<2x32xf32>
    %c0_43 = arith.constant 0 : index
    %c5_44 = arith.constant 5 : index
    %c0_45 = arith.constant 0 : index
    %110 = vector.load %arg5[%c0_43, %c5_44, %c0_45] : memref<2x8x32xf32, #tpu.memory_space<vmem>>, vector<2x1x32xf32>
    %111 = vector.shape_cast %110 : vector<2x1x32xf32> to vector<2x32xf32>
    %112 = vector.shape_cast %109 : vector<2x32xf32> to vector<2x1x32xf32>
    tpu.vector_store %arg5[%c0_43, %c5_44, %c0_45], %112 {strides = array<i32>} : memref<2x8x32xf32, #tpu.memory_space<vmem>>, vector<2x1x32xf32>,
    %cst_46 = arith.constant dense<0.000000e+00> : vector<2x64xf32>
    %113 = tpu.matmul %109, %4, %cst_46 {dimension_numbers = #tpu.dot_dimension_numbers<[1], [0], [0], [1], [0, 0, 1, 1], [], []>} : vector<2x32xf32>, vector<32x64xf32>, vector<2x64xf32> -> vector<2x64xf32>
    %c0_47 = arith.constant 0 : index
    %c6 = arith.constant 6 : index
    %c0_48 = arith.constant 0 : index
    %114 = vector.load %arg2[%c0_47, %c6, %c0_48] : memref<2x8x64xf32, #tpu.memory_space<vmem>>, vector<2x1x64xf32>
    %115 = vector.shape_cast %114 : vector<2x1x64xf32> to vector<2x64xf32>
    %116 = arith.addf %115, %113 : vector<2x64xf32>
    %117 = vector.extract_strided_slice %116 {offsets = [0, 0], sizes = [2, 32], strides = [1, 1]} : vector<2x64xf32> to vector<2x32xf32>
    %118 = arith.negf %117 : vector<2x32xf32>
    %119 = math.exp %118 : vector<2x32xf32>
    %cst_49 = arith.constant 1.000000e+00 : f32
    %120 = vector.broadcast %cst_49 : f32 to vector<2x32xf32>
    %121 = arith.addf %120, %119 : vector<2x32xf32>
    %122 = arith.divf %120, %121 : vector<2x32xf32>
    %123 = vector.extract_strided_slice %116 {offsets = [0, 32], sizes = [2, 32], strides = [1, 1]} : vector<2x64xf32> to vector<2x32xf32>
    %124 = math.tanh %123 : vector<2x32xf32>
    %125 = arith.subf %124, %109 : vector<2x32xf32>
    %126 = arith.mulf %122, %125 : vector<2x32xf32>
    %127 = arith.addf %109, %126 : vector<2x32xf32>
    %c0_50 = arith.constant 0 : index
    %c6_51 = arith.constant 6 : index
    %c0_52 = arith.constant 0 : index
    %128 = vector.load %arg5[%c0_50, %c6_51, %c0_52] : memref<2x8x32xf32, #tpu.memory_space<vmem>>, vector<2x1x32xf32>
    %129 = vector.shape_cast %128 : vector<2x1x32xf32> to vector<2x32xf32>
    %130 = vector.shape_cast %127 : vector<2x32xf32> to vector<2x1x32xf32>
    tpu.vector_store %arg5[%c0_50, %c6_51, %c0_52], %130 {strides = array<i32>} : memref<2x8x32xf32, #tpu.memory_space<vmem>>, vector<2x1x32xf32>,
    %cst_53 = arith.constant dense<0.000000e+00> : vector<2x64xf32>
    %131 = tpu.matmul %127, %4, %cst_53 {dimension_numbers = #tpu.dot_dimension_numbers<[1], [0], [0], [1], [0, 0, 1, 1], [], []>} : vector<2x32xf32>, vector<32x64xf32>, vector<2x64xf32> -> vector<2x64xf32>
    %c0_54 = arith.constant 0 : index
    %c7 = arith.constant 7 : index
    %c0_55 = arith.constant 0 : index
    %132 = vector.load %arg2[%c0_54, %c7, %c0_55] : memref<2x8x64xf32, #tpu.memory_space<vmem>>, vector<2x1x64xf32>
    %133 = vector.shape_cast %132 : vector<2x1x64xf32> to vector<2x64xf32>
    %134 = arith.addf %133, %131 : vector<2x64xf32>
    %135 = vector.extract_strided_slice %134 {offsets = [0, 0], sizes = [2, 32], strides = [1, 1]} : vector<2x64xf32> to vector<2x32xf32>
    %136 = arith.negf %135 : vector<2x32xf32>
    %137 = math.exp %136 : vector<2x32xf32>
    %cst_56 = arith.constant 1.000000e+00 : f32
    %138 = vector.broadcast %cst_56 : f32 to vector<2x32xf32>
    %139 = arith.addf %138, %137 : vector<2x32xf32>
    %140 = arith.divf %138, %139 : vector<2x32xf32>
    %141 = vector.extract_strided_slice %134 {offsets = [0, 32], sizes = [2, 32], strides = [1, 1]} : vector<2x64xf32> to vector<2x32xf32>
    %142 = math.tanh %141 : vector<2x32xf32>
    %143 = arith.subf %142, %127 : vector<2x32xf32>
    %144 = arith.mulf %140, %143 : vector<2x32xf32>
    %145 = arith.addf %127, %144 : vector<2x32xf32>
    %c0_57 = arith.constant 0 : index
    %c7_58 = arith.constant 7 : index
    %c0_59 = arith.constant 0 : index
    %146 = vector.load %arg5[%c0_57, %c7_58, %c0_59] : memref<2x8x32xf32, #tpu.memory_space<vmem>>, vector<2x1x32xf32>
    %147 = vector.shape_cast %146 : vector<2x1x32xf32> to vector<2x32xf32>
    %148 = vector.shape_cast %145 : vector<2x32xf32> to vector<2x1x32xf32>
    tpu.vector_store %arg5[%c0_57, %c7_58, %c0_59], %148 {strides = array<i32>} : memref<2x8x32xf32, #tpu.memory_space<vmem>>, vector<2x1x32xf32>,
    %c0_60 = arith.constant 0 : index
    %c0_61 = arith.constant 0 : index
    %149 = vector.load %arg6[%c0_60, %c0_61] : memref<2x32xf32, #tpu.memory_space<vmem>>, vector<2x32xf32>
    tpu.vector_store %arg6[%c0_60, %c0_61], %145 {strides = array<i32>} : memref<2x32xf32, #tpu.memory_space<vmem>>, vector<2x32xf32>,
    return
  }
  func.func @transform_0(%arg0: i32, %arg1: i32) -> (i32, i32, i32) {
    %c0_i32 = arith.constant 0 : i32
    %c0_i32_0 = arith.constant 0 : i32
    return %arg0, %arg1, %c0_i32 : i32, i32, i32
  }
  func.func @transform_1(%arg0: i32, %arg1: i32) -> (i32, i32) {
    %c0_i32 = arith.constant 0 : i32
    %c0_i32_0 = arith.constant 0 : i32
    return %arg0, %c0_i32 : i32, i32
  }
  func.func @transform_2(%arg0: i32, %arg1: i32) -> (i32, i32) {
    %c0_i32 = arith.constant 0 : i32
    %c0_i32_0 = arith.constant 0 : i32
    %c0_i32_1 = arith.constant 0 : i32
    return %c0_i32, %c0_i32_0 : i32, i32
  }
  func.func @transform_3(%arg0: i32, %arg1: i32) -> (i32, i32, i32) {
    %c0_i32 = arith.constant 0 : i32
    %c0_i32_0 = arith.constant 0 : i32
    return %arg0, %arg1, %c0_i32 : i32, i32, i32
  }
}

</mosaic_0001>

<llo_original>
// kernel: mingru_layer.2
$region0: #{mingru_layer.2}
  #allocation0 [shape = 'u32[]', space=smem, size = 0x4, offset = 0x4, fixed_abs, tag = 'smem constant byte address 0x4 - core index']
  #allocation1 [shape = 'u32[72,128]{1,0:T(1,128)}', space=vmem, size = 0x9000, scoped, tag = 'internal scratch']
  %s0 = inlined_call_operand.hbm [shape: f32[16,16], index: 0, kind: input, shape index: {}]
  %s1 = inlined_call_operand.hbm [shape: f32[16,64], index: 1, kind: input, shape index: {}]
  %s2 = inlined_call_operand.vmem [shape: f32[1,64], index: 2, kind: input, shape index: {}]
  %s3 = inlined_call_operand.vmem [shape: f32[16,64], index: 3, kind: output, shape index: {}]
  %s4 = sld [smem:[#allocation0]]
  $region30: #{mingru_layer.2} parent=0
    _
  %s6 = ssub.s32 1, %s4
  %s7 = scalar_select 0, %s6, %s4
  $region1: #{mingru_layer.2} parent=0
    #allocation2 [shape = 'u8[8192]{0}', space=vmem, size = 0x2000, scoped, tag = 'input window, operand 0, single buffered']
    #allocation3 [shape = 's32[1]{0}', space=sflag, size = 0x4, scoped, tag = 'scoped memory for mingru_layer.2']
    #allocation4 [shape = 'u8[8192]{0}', space=vmem, size = 0x2000, scoped, tag = 'input window, operand 1, single buffered']
    #allocation5 [shape = 's32[1]{0}', space=sflag, size = 0x4, scoped, tag = 'scoped memory for mingru_layer.2']
    %8 = vsyncpa [#allocation3], 0
    %9 = vsyncpa [#allocation5], 0
    // Predicated region
    $region2: #{mingru_layer.2} parent=1 // pred_check
      _
    $region3: #{mingru_layer.2} parent=1 // pred_check_branch
      %11 = sbr.rel (0) target = $region5
    $region4: #{mingru_layer.2} parent=1 // pred_region
      %13 = vsyncadd [#allocation3], 0
      %s14 = sshll.u32 %s0, 4
      %s15 = int_to_ptr.hbm [resolvable:$true] %s14
      %s16 = sshll.u32 [#allocation2], 4
      %s17 = int_to_ptr.vmem [resolvable:$true] %s16
      %22 = dma.hbm_to_vmem [thread:$0]  %s15, 256, %s17, [#allocation3], 128, 128, 8
    $region5: #{mingru_layer.2} parent=1 // pred_fallthru
      _
    // Predicated region
    $region6: #{mingru_layer.2} parent=1 // pred_check
      _
    $region7: #{mingru_layer.2} parent=1 // pred_check_branch
      %24 = sbr.rel (0) target = $region9
    $region8: #{mingru_layer.2} parent=1 // pred_region
      %26 = vsyncadd [#allocation5], 0
      %s27 = sshll.u32 %s1, 4
      %s28 = int_to_ptr.hbm [resolvable:$true] %s27
      %s29 = sshll.u32 [#allocation4], 4
      %s30 = int_to_ptr.vmem [resolvable:$true] %s29
      %35 = dma.hbm_to_vmem [thread:$0]  %s28, 256, %s30, [#allocation5], 128, 128, 8
    $region9: #{mingru_layer.2} parent=1 // pred_fallthru
      _
    // Predicated region
    $region10: #{mingru_layer.2} parent=1 // pred_check
      _
    $region11: #{mingru_layer.2} parent=1 // pred_check_branch
      %37 = sbr.rel (0) target = $region13
    $region12: #{mingru_layer.2} parent=1 // pred_region
      _
    $region13: #{mingru_layer.2} parent=1 // pred_fallthru
      _
    // Predicated region
    $region14: #{mingru_layer.2} parent=1 // pred_check
      _
    $region15: #{mingru_layer.2} parent=1 // pred_check_branch
      %39 = sbr.rel (0) target = $region17
    $region16: #{mingru_layer.2} parent=1 // pred_region
      %41 = dma.done [#allocation3], 256
    $region17: #{mingru_layer.2} parent=1 // pred_fallthru
      _
    // Predicated region
    $region18: #{mingru_layer.2} parent=1 // pred_check
      _
    $region19: #{mingru_layer.2} parent=1 // pred_check_branch
      %43 = sbr.rel (0) target = $region21
    $region20: #{mingru_layer.2} parent=1 // pred_region
      %45 = dma.done [#allocation5], 256
    $region21: #{mingru_layer.2} parent=1 // pred_fallthru
      _
    %v46 = vld [vmem:[#allocation2] sm:$0xff]
    %v47 = vld [vmem:[#allocation2 + $0x8] sm:$0xff]
    %v48 = vld [vmem:[#allocation4] sm:$0xff]
    %v49 = vld [vmem:[#allocation4 + $0x8] sm:$0xff]
    %v50 = vld [vmem:[%s2] sm:$0x1]
    %v52 = vperm.slane %v50, 0
    %vm54 = vcmask 130048
    %v56 = vsel %vm54, %v46, 0
    %v59 = vsel %vm54, %v47, 0
    %61 = vmatpush.msra.mxu0 0.0
    %62 = vmatpush.msra.mxu0 0.0
    %63 = vmatpush.msra.mxu0 0.0
    %64 = vmatpush.msra.mxu0 0.0
    %65 = vmatpush.msra.mxu0 0.0
    %66 = vmatpush.msra.mxu0 0.0
    %67 = vmatpush.msra.mxu0 0.0
    %68 = vmatpush.msra.mxu0 0.0
    %69 = vmatpush.msra.mxu0 0.0
    %70 = vmatpush.msra.mxu0 0.0
    %71 = vmatpush.msra.mxu0 0.0
    %72 = vmatpush.msra.mxu0 0.0
    %73 = vmatpush.msra.mxu0 0.0
    %74 = vmatpush.msra.mxu0 0.0
    %75 = vmatpush.msra.mxu0 %v49
    %76 = vmatpush.msra.mxu0 %v48
    %77 = vmatmul.f32.gmra.mxu0 %v56
    %v78 = vpop.f32.mrf.mxu0
    %v79 = vadd.f32 %v52, %v78
    %80 = vmatmul.f32.gmra.mxu0 %v59
    %v81 = vpop.f32.mrf.mxu0
    %v82 = vadd.f32 %v52, %v81
    %83 = vdwg.mxu0
    %vm84 = vcmask 523264
    %85 = vst.msk [vmem:[%s3] sm:$0xff] %vm84, %v79
    %86 = vst.msk [vmem:[%s3 + $0x8] sm:$0xff] %vm84, %v82
    // Predicated region
    $region22: #{mingru_layer.2} parent=1 // pred_check
      _
    $region23: #{mingru_layer.2} parent=1 // pred_check_branch
      %88 = sbr.rel (0) target = $region25
    $region24: #{mingru_layer.2} parent=1 // pred_region
      _
    $region25: #{mingru_layer.2} parent=1 // pred_fallthru
      _
    // Predicated region
    $region26: #{mingru_layer.2} parent=1 // pred_check
      _
    $region27: #{mingru_layer.2} parent=1 // pred_check_branch
      %90 = sbr.rel (0) target = $region29
    $region28: #{mingru_layer.2} parent=1 // pred_region
      _
    $region29: #{mingru_layer.2} parent=1 // pred_fallthru
      _
    %91 = vsyncpa [#allocation3], 1
    %92 = vsyncpa [#allocation5], 1

// kernel: mingru_layer.3
$region0: #{mingru_layer.3}
  #allocation0 [shape = 'u32[]', space=smem, size = 0x4, offset = 0x4, fixed_abs, tag = 'smem constant byte address 0x4 - core index']
  #allocation1 [shape = 'u32[72,128]{1,0:T(1,128)}', space=vmem, size = 0x9000, scoped, tag = 'internal scratch']
  #allocation2 [shape = 'f32[2,32]{1,0:T(2,128)}', space=vmem, size = 0x400, scoped, tag = 'scratch operand']
  %s0 = inlined_call_operand.vmem [shape: f32[2,8,64], index: 0, kind: input, shape index: {}]
  %s1 = inlined_call_operand.vmem [shape: f32[2,32], index: 1, kind: input, shape index: {}]
  %s2 = inlined_call_operand.hbm [shape: f32[32,64], index: 2, kind: input, shape index: {}]
  %s3 = inlined_call_operand.vmem [shape: f32[2,8,32], index: 3, kind: output, shape index: {}]
  %s4 = sld [smem:[#allocation0]]
  $region30: #{mingru_layer.3} parent=0
    _
  %s6 = ssub.s32 1, %s4
  %s7 = scalar_select 0, %s6, %s4
  $region1: #{mingru_layer.3} parent=0
    #allocation3 [shape = 'u8[16384]{0}', space=vmem, size = 0x4000, scoped, tag = 'input window, operand 2, single buffered']
    #allocation4 [shape = 's32[1]{0}', space=sflag, size = 0x4, scoped, tag = 'scoped memory for mingru_layer.3']
    %8 = vsyncpa [#allocation4], 0
    // Predicated region
    $region2: #{mingru_layer.3} parent=1 // pred_check
      _
    $region3: #{mingru_layer.3} parent=1 // pred_check_branch
      %10 = sbr.rel (0) target = $region5
    $region4: #{mingru_layer.3} parent=1 // pred_region
      _
    $region5: #{mingru_layer.3} parent=1 // pred_fallthru
      _
    // Predicated region
    $region6: #{mingru_layer.3} parent=1 // pred_check
      _
    $region7: #{mingru_layer.3} parent=1 // pred_check_branch
      %12 = sbr.rel (0) target = $region9
    $region8: #{mingru_layer.3} parent=1 // pred_region
      _
    $region9: #{mingru_layer.3} parent=1 // pred_fallthru
      _
    // Predicated region
    $region10: #{mingru_layer.3} parent=1 // pred_check
      _
    $region11: #{mingru_layer.3} parent=1 // pred_check_branch
      %14 = sbr.rel (0) target = $region13
    $region12: #{mingru_layer.3} parent=1 // pred_region
      %16 = vsyncadd [#allocation4], 0
      %s17 = sshll.u32 %s2, 4
      %s18 = int_to_ptr.hbm [resolvable:$true] %s17
      %s19 = sshll.u32 [#allocation3], 4
      %s20 = int_to_ptr.vmem [resolvable:$true] %s19
      %25 = dma.hbm_to_vmem [thread:$0]  %s18, 512, %s20, [#allocation4], 128, 128, 8
    $region13: #{mingru_layer.3} parent=1 // pred_fallthru
      _
    // Predicated region
    $region14: #{mingru_layer.3} parent=1 // pred_check
      _
    $region15: #{mingru_layer.3} parent=1 // pred_check_branch
      %27 = sbr.rel (0) target = $region17
    $region16: #{mingru_layer.3} parent=1 // pred_region
      %29 = dma.done [#allocation4], 512
    $region17: #{mingru_layer.3} parent=1 // pred_fallthru
      _
    %p30 = scmp.eq.s32.totalorder 0, 0
    // Predicated region
    $region18: #{mingru_layer.3} parent=1 // pred_check
      %p31 = pneg %p30
    $region19: #{mingru_layer.3} parent=1 // pred_check_branch
      %33 = sbr.rel (%p31) target = $region21
    $region20: #{mingru_layer.3} parent=1 // pred_region
      %v34 = vld [vmem:[%s1] sm:$0x3]
      %vm35 = vcmask 254976
      %36 = vst.msk [vmem:[#allocation2] sm:$0x3] %vm35, %v34
    $region21: #{mingru_layer.3} parent=1 // pred_fallthru
      _
    %v37 = vld [vmem:[#allocation2] sm:$0x3]
    %v38 = vld [vmem:[#allocation3] sm:$0xff]
    %v39 = vld [vmem:[#allocation3 + $0x8] sm:$0xff]
    %v40 = vld [vmem:[#allocation3 + $0x10] sm:$0xff]
    %v41 = vld [vmem:[#allocation3 + $0x18] sm:$0xff]
    %vm42 = vcmask 261120
    %v44 = vsel %vm42, %v37, 0
    %46 = vmatpush.msra.mxu0 0.0
    %47 = vmatpush.msra.mxu0 0.0
    %48 = vmatpush.msra.mxu0 0.0
    %49 = vmatpush.msra.mxu0 0.0
    %50 = vmatpush.msra.mxu0 0.0
    %51 = vmatpush.msra.mxu0 0.0
    %52 = vmatpush.msra.mxu0 0.0
    %53 = vmatpush.msra.mxu0 0.0
    %54 = vmatpush.msra.mxu0 0.0
    %55 = vmatpush.msra.mxu0 0.0
    %56 = vmatpush.msra.mxu0 0.0
    %57 = vmatpush.msra.mxu0 0.0
    %58 = vmatpush.msra.mxu0 %v41
    %59 = vmatpush.msra.mxu0 %v40
    %60 = vmatpush.msra.mxu0 %v39
    %61 = vmatpush.msra.mxu0 %v38
    %62 = vmatmul.f32.gmra.mxu0 %v44
    %v63 = vpop.f32.mrf.mxu0
    %v64 = vadd.f32 0.0, %v63
    %65 = vdwg.mxu0
    %v66 = vld [vmem:[%s0] sm:$0x1]
    %v67 = vld [vmem:[%s0 + $0x8] sm:$0x1]
    %v69 = vrot.slane %v64, 1
    %v72 = vadd.f32 %v66, %v64
    %v73 = vadd.f32 %v67, %v69
    %v74 = vxor.u32 %v72, 2147483648
    %v75 = vxor.u32 %v73, 2147483648
    %v76 = vmul.f32 %v74, 1.442695
    %v77 = vpow.pop %v76
    %v78 = vmul.f32 %v75, 1.442695
    %v79 = vpow.pop %v78
    %v80 = vadd.f32 %v77, 1.0
    %v81 = vadd.f32 %v79, 1.0
    %v82 = vrcp.pop %v80
    %v83 = vmul.f32 %v80, %v82
    %v84 = vsub.f32 1.0, %v83
    %v85 = vmul.f32 %v82, %v84
    %v86 = vadd.f32 %v82, %v85
    %vm87 = vweird.f32 %v80
    %vm88 = vweird.f32 %v82
    %vm89 = vmor %vm87, %vm88
    %v90 = vsel %vm89, %v82, %v86
    %v91 = vand.u32 2147483647, %v80
    %vm92 = vcmp.eq.f32.partialorder %v91, 8.507059e+37
    %v93 = vand.u32 %v80, 2147483648
    %v94 = vor.u32 1.1754944e-38, %v93
    %v95 = vsel %vm92, %v94, %v90
    %v96 = vmul.f32 1.0, %v95
    %v97 = vrcp.pop %v81
    %v98 = vmul.f32 %v81, %v97
    %v99 = vsub.f32 1.0, %v98
    %v100 = vmul.f32 %v97, %v99
    %v101 = vadd.f32 %v97, %v100
    %vm102 = vweird.f32 %v81
    %vm103 = vweird.f32 %v97
    %vm104 = vmor %vm102, %vm103
    %v105 = vsel %vm104, %v97, %v101
    %v106 = vand.u32 2147483647, %v81
    %vm107 = vcmp.eq.f32.partialorder %v106, 8.507059e+37
    %v108 = vand.u32 %v81, 2147483648
    %v109 = vor.u32 1.1754944e-38, %v108
    %v110 = vsel %vm107, %v109, %v105
    %v111 = vmul.f32 1.0, %v110
    %v112 = vtanh.pop %v72
    %v113 = vtanh.pop %v73
    %v114 = vrot.slane %v37, 1
    %115 = vrot.lane.b32.xlu0 %v37, 32
    %v116 = vpop.permute.xlu0 %115
    %117 = vrot.lane.b32.xlu0 %v114, 32
    %v118 = vpop.permute.xlu0 %117
    %v121 = vsub.f32 %v112, %v116
    %v122 = vsub.f32 %v113, %v118
    %125 = vrot.lane.b32.xlu0 %v121, 96
    %v126 = vpop.permute.xlu0 %125
    %127 = vrot.lane.b32.xlu0 %v122, 96
    %v128 = vpop.permute.xlu0 %127
    %v131 = vmul.f32 %v96, %v126
    %v132 = vmul.f32 %v111, %v128
    %v135 = vrot.slane %v132, 7
    %vm136 = vcmask 1041409
    %v137 = vsel %vm136, %v135, %v131
    %v139 = vadd.f32 %v37, %v137
    %v141 = vrot.slane %v139, 1
    %vm143 = vcmask 253952
    %144 = vst.msk [vmem:[%s3] sm:$0x1] %vm143, %v139
    %145 = vst.msk [vmem:[%s3 + $0x8] sm:$0x1] %vm143, %v141
    %v146 = vsel %vm42, %v139, 0
    %148 = vmatpush.msra.mxu0 0.0
    %149 = vmatpush.msra.mxu0 0.0
    %150 = vmatpush.msra.mxu0 0.0
    %151 = vmatpush.msra.mxu0 0.0
    %152 = vmatpush.msra.mxu0 0.0
    %153 = vmatpush.msra.mxu0 0.0
    %154 = vmatpush.msra.mxu0 0.0
    %155 = vmatpush.msra.mxu0 0.0
    %156 = vmatpush.msra.mxu0 0.0
    %157 = vmatpush.msra.mxu0 0.0
    %158 = vmatpush.msra.mxu0 0.0
    %159 = vmatpush.msra.mxu0 0.0
    %160 = vmatpush.msra.mxu0 %v41
    %161 = vmatpush.msra.mxu0 %v40
    %162 = vmatpush.msra.mxu0 %v39
    %163 = vmatpush.msra.mxu0 %v38
    %164 = vmatmul.f32.gmra.mxu0 %v146
    %v165 = vpop.f32.mrf.mxu0
    %v166 = vadd.f32 0.0, %v165
    %167 = vdwg.mxu0
    %v168 = vld [vmem:[%s0 + $0x1] sm:$0x1]
    %v169 = vld [vmem:[%s0 + $0x9] sm:$0x1]
    %v171 = vrot.slane %v166, 1
    %v174 = vadd.f32 %v168, %v166
    %v175 = vadd.f32 %v169, %v171
    %v176 = vxor.u32 %v174, 2147483648
    %v177 = vxor.u32 %v175, 2147483648
    %v178 = vmul.f32 %v176, 1.442695
    %v179 = vpow.pop %v178
    %v180 = vmul.f32 %v177, 1.442695
    %v181 = vpow.pop %v180
    %v182 = vadd.f32 %v179, 1.0
    %v183 = vadd.f32 %v181, 1.0
    %v184 = vrcp.pop %v182
    %v185 = vmul.f32 %v182, %v184
    %v186 = vsub.f32 1.0, %v185
    %v187 = vmul.f32 %v184, %v186
    %v188 = vadd.f32 %v184, %v187
    %vm189 = vweird.f32 %v182
    %vm190 = vweird.f32 %v184
    %vm191 = vmor %vm189, %vm190
    %v192 = vsel %vm191, %v184, %v188
    %v193 = vand.u32 2147483647, %v182
    %vm194 = vcmp.eq.f32.partialorder %v193, 8.507059e+37
    %v195 = vand.u32 %v182, 2147483648
    %v196 = vor.u32 1.1754944e-38, %v195
    %v197 = vsel %vm194, %v196, %v192
    %v198 = vmul.f32 1.0, %v197
    %v199 = vrcp.pop %v183
    %v200 = vmul.f32 %v183, %v199
    %v201 = vsub.f32 1.0, %v200
    %v202 = vmul.f32 %v199, %v201
    %v203 = vadd.f32 %v199, %v202
    %vm204 = vweird.f32 %v183
    %vm205 = vweird.f32 %v199
    %vm206 = vmor %vm204, %vm205
    %v207 = vsel %vm206, %v199, %v203
    %v208 = vand.u32 2147483647, %v183
    %vm209 = vcmp.eq.f32.partialorder %v208, 8.507059e+37
    %v210 = vand.u32 %v183, 2147483648
    %v211 = vor.u32 1.1754944e-38, %v210
    %v212 = vsel %vm209, %v211, %v207
    %v213 = vmul.f32 1.0, %v212
    %v214 = vtanh.pop %v174
    %v215 = vtanh.pop %v175
    %216 = vrot.lane.b32.xlu0 %v139, 32
    %v217 = vpop.permute.xlu0 %216
    %218 = vrot.lane.b32.xlu0 %v141, 32
    %v219 = vpop.permute.xlu0 %218
    %v222 = vsub.f32 %v214, %v217
    %v223 = vsub.f32 %v215, %v219
    %226 = vrot.lane.b32.xlu0 %v222, 96
    %v227 = vpop.permute.xlu0 %226
    %228 = vrot.lane.b32.xlu0 %v223, 96
    %v229 = vpop.permute.xlu0 %228
    %v232 = vmul.f32 %v198, %v227
    %v233 = vmul.f32 %v213, %v229
    %v236 = vrot.slane %v233, 7
    %v237 = vsel %vm136, %v236, %v232
    %v239 = vadd.f32 %v139, %v237
    %v241 = vrot.slane %v239, 1
    %243 = vst.msk [vmem:[%s3 + $0x1] sm:$0x1] %vm143, %v239
    %244 = vst.msk [vmem:[%s3 + $0x9] sm:$0x1] %vm143, %v241
    %v245 = vsel %vm42, %v239, 0
    %247 = vmatpush.msra.mxu0 0.0
    %248 = vmatpush.msra.mxu0 0.0
    %249 = vmatpush.msra.mxu0 0.0
    %250 = vmatpush.msra.mxu0 0.0
    %251 = vmatpush.msra.mxu0 0.0
    %252 = vmatpush.msra.mxu0 0.0
    %253 = vmatpush.msra.mxu0 0.0
    %254 = vmatpush.msra.mxu0 0.0
    %255 = vmatpush.msra.mxu0 0.0
    %256 = vmatpush.msra.mxu0 0.0
    %257 = vmatpush.msra.mxu0 0.0
    %258 = vmatpush.msra.mxu0 0.0
    %259 = vmatpush.msra.mxu0 %v41
    %260 = vmatpush.msra.mxu0 %v40
    %261 = vmatpush.msra.mxu0 %v39
    %262 = vmatpush.msra.mxu0 %v38
    %263 = vmatmul.f32.gmra.mxu0 %v245
    %v264 = vpop.f32.mrf.mxu0
    %v265 = vadd.f32 0.0, %v264
    %266 = vdwg.mxu0
    %v267 = vld [vmem:[%s0 + $0x2] sm:$0x1]
    %v268 = vld [vmem:[%s0 + $0xa] sm:$0x1]
    %v270 = vrot.slane %v265, 1
    %v273 = vadd.f32 %v267, %v265
    %v274 = vadd.f32 %v268, %v270
    %v275 = vxor.u32 %v273, 2147483648
    %v276 = vxor.u32 %v274, 2147483648
    %v277 = vmul.f32 %v275, 1.442695
    %v278 = vpow.pop %v277
    %v279 = vmul.f32 %v276, 1.442695
    %v280 = vpow.pop %v279
    %v281 = vadd.f32 %v278, 1.0
    %v282 = vadd.f32 %v280, 1.0
    %v283 = vrcp.pop %v281
    %v284 = vmul.f32 %v281, %v283
    %v285 = vsub.f32 1.0, %v284
    %v286 = vmul.f32 %v283, %v285
    %v287 = vadd.f32 %v283, %v286
    %vm288 = vweird.f32 %v281
    %vm289 = vweird.f32 %v283
    %vm290 = vmor %vm288, %vm289
    %v291 = vsel %vm290, %v283, %v287
    %v292 = vand.u32 2147483647, %v281
    %vm293 = vcmp.eq.f32.partialorder %v292, 8.507059e+37
    %v294 = vand.u32 %v281, 2147483648
    %v295 = vor.u32 1.1754944e-38, %v294
    %v296 = vsel %vm293, %v295, %v291
    %v297 = vmul.f32 1.0, %v296
    %v298 = vrcp.pop %v282
    %v299 = vmul.f32 %v282, %v298
    %v300 = vsub.f32 1.0, %v299
    %v301 = vmul.f32 %v298, %v300
    %v302 = vadd.f32 %v298, %v301
    %vm303 = vweird.f32 %v282
    %vm304 = vweird.f32 %v298
    %vm305 = vmor %vm303, %vm304
    %v306 = vsel %vm305, %v298, %v302
    %v307 = vand.u32 2147483647, %v282
    %vm308 = vcmp.eq.f32.partialorder %v307, 8.507059e+37
    %v309 = vand.u32 %v282, 2147483648
    %v310 = vor.u32 1.1754944e-38, %v309
    %v311 = vsel %vm308, %v310, %v306
    %v312 = vmul.f32 1.0, %v311
    %v313 = vtanh.pop %v273
    %v314 = vtanh.pop %v274
    %315 = vrot.lane.b32.xlu0 %v239, 32
    %v316 = vpop.permute.xlu0 %315
    %317 = vrot.lane.b32.xlu0 %v241, 32
    %v318 = vpop.permute.xlu0 %317
    %v321 = vsub.f32 %v313, %v316
    %v322 = vsub.f32 %v314, %v318
    %325 = vrot.lane.b32.xlu0 %v321, 96
    %v326 = vpop.permute.xlu0 %325
    %327 = vrot.lane.b32.xlu0 %v322, 96
    %v328 = vpop.permute.xlu0 %327
    %v331 = vmul.f32 %v297, %v326
    %v332 = vmul.f32 %v312, %v328
    %v335 = vrot.slane %v332, 7
    %v336 = vsel %vm136, %v335, %v331
    %v338 = vadd.f32 %v239, %v336
    %v340 = vrot.slane %v338, 1
    %342 = vst.msk [vmem:[%s3 + $0x2] sm:$0x1] %vm143, %v338
    %343 = vst.msk [vmem:[%s3 + $0xa] sm:$0x1] %vm143, %v340
    %v344 = vsel %vm42, %v338, 0
    %346 = vmatpush.msra.mxu0 0.0
    %347 = vmatpush.msra.mxu0 0.0
    %348 = vmatpush.msra.mxu0 0.0
    %349 = vmatpush.msra.mxu0 0.0
    %350 = vmatpush.msra.mxu0 0.0
    %351 = vmatpush.msra.mxu0 0.0
    %352 = vmatpush.msra.mxu0 0.0
    %353 = vmatpush.msra.mxu0 0.0
    %354 = vmatpush.msra.mxu0 0.0
    %355 = vmatpush.msra.mxu0 0.0
    %356 = vmatpush.msra.mxu0 0.0
    %357 = vmatpush.msra.mxu0 0.0
    %358 = vmatpush.msra.mxu0 %v41
    %359 = vmatpush.msra.mxu0 %v40
    %360 = vmatpush.msra.mxu0 %v39
    %361 = vmatpush.msra.mxu0 %v38
    %362 = vmatmul.f32.gmra.mxu0 %v344
    %v363 = vpop.f32.mrf.mxu0
    %v364 = vadd.f32 0.0, %v363
    %365 = vdwg.mxu0
    %v366 = vld [vmem:[%s0 + $0x3] sm:$0x1]
    %v367 = vld [vmem:[%s0 + $0xb] sm:$0x1]
    %v369 = vrot.slane %v364, 1
    %v372 = vadd.f32 %v366, %v364
    %v373 = vadd.f32 %v367, %v369
    %v374 = vxor.u32 %v372, 2147483648
    %v375 = vxor.u32 %v373, 2147483648
    %v376 = vmul.f32 %v374, 1.442695
    %v377 = vpow.pop %v376
    %v378 = vmul.f32 %v375, 1.442695
    %v379 = vpow.pop %v378
    %v380 = vadd.f32 %v377, 1.0
    %v381 = vadd.f32 %v379, 1.0
    %v382 = vrcp.pop %v380
    %v383 = vmul.f32 %v380, %v382
    %v384 = vsub.f32 1.0, %v383
    %v385 = vmul.f32 %v382, %v384
    %v386 = vadd.f32 %v382, %v385
    %vm387 = vweird.f32 %v380
    %vm388 = vweird.f32 %v382
    %vm389 = vmor %vm387, %vm388
    %v390 = vsel %vm389, %v382, %v386
    %v391 = vand.u32 2147483647, %v380
    %vm392 = vcmp.eq.f32.partialorder %v391, 8.507059e+37
    %v393 = vand.u32 %v380, 2147483648
    %v394 = vor.u32 1.1754944e-38, %v393
    %v395 = vsel %vm392, %v394, %v390
    %v396 = vmul.f32 1.0, %v395
    %v397 = vrcp.pop %v381
    %v398 = vmul.f32 %v381, %v397
    %v399 = vsub.f32 1.0, %v398
    %v400 = vmul.f32 %v397, %v399
    %v401 = vadd.f32 %v397, %v400
    %vm402 = vweird.f32 %v381
    %vm403 = vweird.f32 %v397
    %vm404 = vmor %vm402, %vm403
    %v405 = vsel %vm404, %v397, %v401
    %v406 = vand.u32 2147483647, %v381
    %vm407 = vcmp.eq.f32.partialorder %v406, 8.507059e+37
    %v408 = vand.u32 %v381, 2147483648
    %v409 = vor.u32 1.1754944e-38, %v408
    %v410 = vsel %vm407, %v409, %v405
    %v411 = vmul.f32 1.0, %v410
    %v412 = vtanh.pop %v372
    %v413 = vtanh.pop %v373
    %414 = vrot.lane.b32.xlu0 %v338, 32
    %v415 = vpop.permute.xlu0 %414
    %416 = vrot.lane.b32.xlu0 %v340, 32
    %v417 = vpop.permute.xlu0 %416
    %v420 = vsub.f32 %v412, %v415
    %v421 = vsub.f32 %v413, %v417
    %424 = vrot.lane.b32.xlu0 %v420, 96
    %v425 = vpop.permute.xlu0 %424
    %426 = vrot.lane.b32.xlu0 %v421, 96
    %v427 = vpop.permute.xlu0 %426
    %v430 = vmul.f32 %v396, %v425
    %v431 = vmul.f32 %v411, %v427
    %v434 = vrot.slane %v431, 7
    %v435 = vsel %vm136, %v434, %v430
    %v437 = vadd.f32 %v338, %v435
    %v439 = vrot.slane %v437, 1
    %441 = vst.msk [vmem:[%s3 + $0x3] sm:$0x1] %vm143, %v437
    %442 = vst.msk [vmem:[%s3 + $0xb] sm:$0x1] %vm143, %v439
    %v443 = vsel %vm42, %v437, 0
    %445 = vmatpush.msra.mxu0 0.0
    %446 = vmatpush.msra.mxu0 0.0
    %447 = vmatpush.msra.mxu0 0.0
    %448 = vmatpush.msra.mxu0 0.0
    %449 = vmatpush.msra.mxu0 0.0
    %450 = vmatpush.msra.mxu0 0.0
    %451 = vmatpush.msra.mxu0 0.0
    %452 = vmatpush.msra.mxu0 0.0
    %453 = vmatpush.msra.mxu0 0.0
    %454 = vmatpush.msra.mxu0 0.0
    %455 = vmatpush.msra.mxu0 0.0
    %456 = vmatpush.msra.mxu0 0.0
    %457 = vmatpush.msra.mxu0 %v41
    %458 = vmatpush.msra.mxu0 %v40
    %459 = vmatpush.msra.mxu0 %v39
    %460 = vmatpush.msra.mxu0 %v38
    %461 = vmatmul.f32.gmra.mxu0 %v443
    %v462 = vpop.f32.mrf.mxu0
    %v463 = vadd.f32 0.0, %v462
    %464 = vdwg.mxu0
    %v465 = vld [vmem:[%s0 + $0x4] sm:$0x1]
    %v466 = vld [vmem:[%s0 + $0xc] sm:$0x1]
    %v468 = vrot.slane %v463, 1
    %v471 = vadd.f32 %v465, %v463
    %v472 = vadd.f32 %v466, %v468
    %v473 = vxor.u32 %v471, 2147483648
    %v474 = vxor.u32 %v472, 2147483648
    %v475 = vmul.f32 %v473, 1.442695
    %v476 = vpow.pop %v475
    %v477 = vmul.f32 %v474, 1.442695
    %v478 = vpow.pop %v477
    %v479 = vadd.f32 %v476, 1.0
    %v480 = vadd.f32 %v478, 1.0
    %v481 = vrcp.pop %v479
    %v482 = vmul.f32 %v479, %v481
    %v483 = vsub.f32 1.0, %v482
    %v484 = vmul.f32 %v481, %v483
    %v485 = vadd.f32 %v481, %v484
    %vm486 = vweird.f32 %v479
    %vm487 = vweird.f32 %v481
    %vm488 = vmor %vm486, %vm487
    %v489 = vsel %vm488, %v481, %v485
    %v490 = vand.u32 2147483647, %v479
    %vm491 = vcmp.eq.f32.partialorder %v490, 8.507059e+37
    %v492 = vand.u32 %v479, 2147483648
    %v493 = vor.u32 1.1754944e-38, %v492
    %v494 = vsel %vm491, %v493, %v489
    %v495 = vmul.f32 1.0, %v494
    %v496 = vrcp.pop %v480
    %v497 = vmul.f32 %v480, %v496
    %v498 = vsub.f32 1.0, %v497
    %v499 = vmul.f32 %v496, %v498
    %v500 = vadd.f32 %v496, %v499
    %vm501 = vweird.f32 %v480
    %vm502 = vweird.f32 %v496
    %vm503 = vmor %vm501, %vm502
    %v504 = vsel %vm503, %v496, %v500
    %v505 = vand.u32 2147483647, %v480
    %vm506 = vcmp.eq.f32.partialorder %v505, 8.507059e+37
    %v507 = vand.u32 %v480, 2147483648
    %v508 = vor.u32 1.1754944e-38, %v507
    %v509 = vsel %vm506, %v508, %v504
    %v510 = vmul.f32 1.0, %v509
    %v511 = vtanh.pop %v471
    %v512 = vtanh.pop %v472
    %513 = vrot.lane.b32.xlu0 %v437, 32
    %v514 = vpop.permute.xlu0 %513
    %515 = vrot.lane.b32.xlu0 %v439, 32
    %v516 = vpop.permute.xlu0 %515
    %v519 = vsub.f32 %v511, %v514
    %v520 = vsub.f32 %v512, %v516
    %523 = vrot.lane.b32.xlu0 %v519, 96
    %v524 = vpop.permute.xlu0 %523
    %525 = vrot.lane.b32.xlu0 %v520, 96
    %v526 = vpop.permute.xlu0 %525
    %v529 = vmul.f32 %v495, %v524
    %v530 = vmul.f32 %v510, %v526
    %v533 = vrot.slane %v530, 7
    %v534 = vsel %vm136, %v533, %v529
    %v536 = vadd.f32 %v437, %v534
    %v538 = vrot.slane %v536, 1
    %540 = vst.msk [vmem:[%s3 + $0x4] sm:$0x1] %vm143, %v536
    %541 = vst.msk [vmem:[%s3 + $0xc] sm:$0x1] %vm143, %v538
    %v542 = vsel %vm42, %v536, 0
    %544 = vmatpush.msra.mxu0 0.0
    %545 = vmatpush.msra.mxu0 0.0
    %546 = vmatpush.msra.mxu0 0.0
    %547 = vmatpush.msra.mxu0 0.0
    %548 = vmatpush.msra.mxu0 0.0
    %549 = vmatpush.msra.mxu0 0.0
    %550 = vmatpush.msra.mxu0 0.0
    %551 = vmatpush.msra.mxu0 0.0
    %552 = vmatpush.msra.mxu0 0.0
    %553 = vmatpush.msra.mxu0 0.0
    %554 = vmatpush.msra.mxu0 0.0
    %555 = vmatpush.msra.mxu0 0.0
    %556 = vmatpush.msra.mxu0 %v41
    %557 = vmatpush.msra.mxu0 %v40
    %558 = vmatpush.msra.mxu0 %v39
    %559 = vmatpush.msra.mxu0 %v38
    %560 = vmatmul.f32.gmra.mxu0 %v542
    %v561 = vpop.f32.mrf.mxu0
    %v562 = vadd.f32 0.0, %v561
    %563 = vdwg.mxu0
    %v564 = vld [vmem:[%s0 + $0x5] sm:$0x1]
    %v565 = vld [vmem:[%s0 + $0xd] sm:$0x1]
    %v567 = vrot.slane %v562, 1
    %v570 = vadd.f32 %v564, %v562
    %v571 = vadd.f32 %v565, %v567
    %v572 = vxor.u32 %v570, 2147483648
    %v573 = vxor.u32 %v571, 2147483648
    %v574 = vmul.f32 %v572, 1.442695
    %v575 = vpow.pop %v574
    %v576 = vmul.f32 %v573, 1.442695
    %v577 = vpow.pop %v576
    %v578 = vadd.f32 %v575, 1.0
    %v579 = vadd.f32 %v577, 1.0
    %v580 = vrcp.pop %v578
    %v581 = vmul.f32 %v578, %v580
    %v582 = vsub.f32 1.0, %v581
    %v583 = vmul.f32 %v580, %v582
    %v584 = vadd.f32 %v580, %v583
    %vm585 = vweird.f32 %v578
    %vm586 = vweird.f32 %v580
    %vm587 = vmor %vm585, %vm586
    %v588 = vsel %vm587, %v580, %v584
    %v589 = vand.u32 2147483647, %v578
    %vm590 = vcmp.eq.f32.partialorder %v589, 8.507059e+37
    %v591 = vand.u32 %v578, 2147483648
    %v592 = vor.u32 1.1754944e-38, %v591
    %v593 = vsel %vm590, %v592, %v588
    %v594 = vmul.f32 1.0, %v593
    %v595 = vrcp.pop %v579
    %v596 = vmul.f32 %v579, %v595
    %v597 = vsub.f32 1.0, %v596
    %v598 = vmul.f32 %v595, %v597
    %v599 = vadd.f32 %v595, %v598
    %vm600 = vweird.f32 %v579
    %vm601 = vweird.f32 %v595
    %vm602 = vmor %vm600, %vm601
    %v603 = vsel %vm602, %v595, %v599
    %v604 = vand.u32 2147483647, %v579
    %vm605 = vcmp.eq.f32.partialorder %v604, 8.507059e+37
    %v606 = vand.u32 %v579, 2147483648
    %v607 = vor.u32 1.1754944e-38, %v606
    %v608 = vsel %vm605, %v607, %v603
    %v609 = vmul.f32 1.0, %v608
    %v610 = vtanh.pop %v570
    %v611 = vtanh.pop %v571
    %612 = vrot.lane.b32.xlu0 %v536, 32
    %v613 = vpop.permute.xlu0 %612
    %614 = vrot.lane.b32.xlu0 %v538, 32
    %v615 = vpop.permute.xlu0 %614
    %v618 = vsub.f32 %v610, %v613
    %v619 = vsub.f32 %v611, %v615
    %622 = vrot.lane.b32.xlu0 %v618, 96
    %v623 = vpop.permute.xlu0 %622
    %624 = vrot.lane.b32.xlu0 %v619, 96
    %v625 = vpop.permute.xlu0 %624
    %v628 = vmul.f32 %v594, %v623
    %v629 = vmul.f32 %v609, %v625
    %v632 = vrot.slane %v629, 7
    %v633 = vsel %vm136, %v632, %v628
    %v635 = vadd.f32 %v536, %v633
    %v637 = vrot.slane %v635, 1
    %639 = vst.msk [vmem:[%s3 + $0x5] sm:$0x1] %vm143, %v635
    %640 = vst.msk [vmem:[%s3 + $0xd] sm:$0x1] %vm143, %v637
    %v641 = vsel %vm42, %v635, 0
    %643 = vmatpush.msra.mxu0 0.0
    %644 = vmatpush.msra.mxu0 0.0
    %645 = vmatpush.msra.mxu0 0.0
    %646 = vmatpush.msra.mxu0 0.0
    %647 = vmatpush.msra.mxu0 0.0
    %648 = vmatpush.msra.mxu0 0.0
    %649 = vmatpush.msra.mxu0 0.0
    %650 = vmatpush.msra.mxu0 0.0
    %651 = vmatpush.msra.mxu0 0.0
    %652 = vmatpush.msra.mxu0 0.0
    %653 = vmatpush.msra.mxu0 0.0
    %654 = vmatpush.msra.mxu0 0.0
    %655 = vmatpush.msra.mxu0 %v41
    %656 = vmatpush.msra.mxu0 %v40
    %657 = vmatpush.msra.mxu0 %v39
    %658 = vmatpush.msra.mxu0 %v38
    %659 = vmatmul.f32.gmra.mxu0 %v641
    %v660 = vpop.f32.mrf.mxu0
    %v661 = vadd.f32 0.0, %v660
    %662 = vdwg.mxu0
    %v663 = vld [vmem:[%s0 + $0x6] sm:$0x1]
    %v664 = vld [vmem:[%s0 + $0xe] sm:$0x1]
    %v666 = vrot.slane %v661, 1
    %v669 = vadd.f32 %v663, %v661
    %v670 = vadd.f32 %v664, %v666
    %v671 = vxor.u32 %v669, 2147483648
    %v672 = vxor.u32 %v670, 2147483648
    %v673 = vmul.f32 %v671, 1.442695
    %v674 = vpow.pop %v673
    %v675 = vmul.f32 %v672, 1.442695
    %v676 = vpow.pop %v675
    %v677 = vadd.f32 %v674, 1.0
    %v678 = vadd.f32 %v676, 1.0
    %v679 = vrcp.pop %v677
    %v680 = vmul.f32 %v677, %v679
    %v681 = vsub.f32 1.0, %v680
    %v682 = vmul.f32 %v679, %v681
    %v683 = vadd.f32 %v679, %v682
    %vm684 = vweird.f32 %v677
    %vm685 = vweird.f32 %v679
    %vm686 = vmor %vm684, %vm685
    %v687 = vsel %vm686, %v679, %v683
    %v688 = vand.u32 2147483647, %v677
    %vm689 = vcmp.eq.f32.partialorder %v688, 8.507059e+37
    %v690 = vand.u32 %v677, 2147483648
    %v691 = vor.u32 1.1754944e-38, %v690
    %v692 = vsel %vm689, %v691, %v687
    %v693 = vmul.f32 1.0, %v692
    %v694 = vrcp.pop %v678
    %v695 = vmul.f32 %v678, %v694
    %v696 = vsub.f32 1.0, %v695
    %v697 = vmul.f32 %v694, %v696
    %v698 = vadd.f32 %v694, %v697
    %vm699 = vweird.f32 %v678
    %vm700 = vweird.f32 %v694
    %vm701 = vmor %vm699, %vm700
    %v702 = vsel %vm701, %v694, %v698
    %v703 = vand.u32 2147483647, %v678
    %vm704 = vcmp.eq.f32.partialorder %v703, 8.507059e+37
    %v705 = vand.u32 %v678, 2147483648
    %v706 = vor.u32 1.1754944e-38, %v705
    %v707 = vsel %vm704, %v706, %v702
    %v708 = vmul.f32 1.0, %v707
    %v709 = vtanh.pop %v669
    %v710 = vtanh.pop %v670
    %711 = vrot.lane.b32.xlu0 %v635, 32
    %v712 = vpop.permute.xlu0 %711
    %713 = vrot.lane.b32.xlu0 %v637, 32
    %v714 = vpop.permute.xlu0 %713
    %v717 = vsub.f32 %v709, %v712
    %v718 = vsub.f32 %v710, %v714
    %721 = vrot.lane.b32.xlu0 %v717, 96
    %v722 = vpop.permute.xlu0 %721
    %723 = vrot.lane.b32.xlu0 %v718, 96
    %v724 = vpop.permute.xlu0 %723
    %v727 = vmul.f32 %v693, %v722
    %v728 = vmul.f32 %v708, %v724
    %v731 = vrot.slane %v728, 7
    %v732 = vsel %vm136, %v731, %v727
    %v734 = vadd.f32 %v635, %v732
    %v736 = vrot.slane %v734, 1
    %738 = vst.msk [vmem:[%s3 + $0x6] sm:$0x1] %vm143, %v734
    %739 = vst.msk [vmem:[%s3 + $0xe] sm:$0x1] %vm143, %v736
    %v740 = vsel %vm42, %v734, 0
    %742 = vmatpush.msra.mxu0 0.0
    %743 = vmatpush.msra.mxu0 0.0
    %744 = vmatpush.msra.mxu0 0.0
    %745 = vmatpush.msra.mxu0 0.0
    %746 = vmatpush.msra.mxu0 0.0
    %747 = vmatpush.msra.mxu0 0.0
    %748 = vmatpush.msra.mxu0 0.0
    %749 = vmatpush.msra.mxu0 0.0
    %750 = vmatpush.msra.mxu0 0.0
    %751 = vmatpush.msra.mxu0 0.0
    %752 = vmatpush.msra.mxu0 0.0
    %753 = vmatpush.msra.mxu0 0.0
    %754 = vmatpush.msra.mxu0 %v41
    %755 = vmatpush.msra.mxu0 %v40
    %756 = vmatpush.msra.mxu0 %v39
    %757 = vmatpush.msra.mxu0 %v38
    %758 = vmatmul.f32.gmra.mxu0 %v740
    %v759 = vpop.f32.mrf.mxu0
    %v760 = vadd.f32 0.0, %v759
    %761 = vdwg.mxu0
    %v762 = vld [vmem:[%s0 + $0x7] sm:$0x1]
    %v763 = vld [vmem:[%s0 + $0xf] sm:$0x1]
    %v765 = vrot.slane %v760, 1
    %v768 = vadd.f32 %v762, %v760
    %v769 = vadd.f32 %v763, %v765
    %v770 = vxor.u32 %v768, 2147483648
    %v771 = vxor.u32 %v769, 2147483648
    %v772 = vmul.f32 %v770, 1.442695
    %v773 = vpow.pop %v772
    %v774 = vmul.f32 %v771, 1.442695
    %v775 = vpow.pop %v774
    %v776 = vadd.f32 %v773, 1.0
    %v777 = vadd.f32 %v775, 1.0
    %v778 = vrcp.pop %v776
    %v779 = vmul.f32 %v776, %v778
    %v780 = vsub.f32 1.0, %v779
    %v781 = vmul.f32 %v778, %v780
    %v782 = vadd.f32 %v778, %v781
    %vm783 = vweird.f32 %v776
    %vm784 = vweird.f32 %v778
    %vm785 = vmor %vm783, %vm784
    %v786 = vsel %vm785, %v778, %v782
    %v787 = vand.u32 2147483647, %v776
    %vm788 = vcmp.eq.f32.partialorder %v787, 8.507059e+37
    %v789 = vand.u32 %v776, 2147483648
    %v790 = vor.u32 1.1754944e-38, %v789
    %v791 = vsel %vm788, %v790, %v786
    %v792 = vmul.f32 1.0, %v791
    %v793 = vrcp.pop %v777
    %v794 = vmul.f32 %v777, %v793
    %v795 = vsub.f32 1.0, %v794
    %v796 = vmul.f32 %v793, %v795
    %v797 = vadd.f32 %v793, %v796
    %vm798 = vweird.f32 %v777
    %vm799 = vweird.f32 %v793
    %vm800 = vmor %vm798, %vm799
    %v801 = vsel %vm800, %v793, %v797
    %v802 = vand.u32 2147483647, %v777
    %vm803 = vcmp.eq.f32.partialorder %v802, 8.507059e+37
    %v804 = vand.u32 %v777, 2147483648
    %v805 = vor.u32 1.1754944e-38, %v804
    %v806 = vsel %vm803, %v805, %v801
    %v807 = vmul.f32 1.0, %v806
    %v808 = vtanh.pop %v768
    %v809 = vtanh.pop %v769
    %810 = vrot.lane.b32.xlu0 %v734, 32
    %v811 = vpop.permute.xlu0 %810
    %812 = vrot.lane.b32.xlu0 %v736, 32
    %v813 = vpop.permute.xlu0 %812
    %v816 = vsub.f32 %v808, %v811
    %v817 = vsub.f32 %v809, %v813
    %820 = vrot.lane.b32.xlu0 %v816, 96
    %v821 = vpop.permute.xlu0 %820
    %822 = vrot.lane.b32.xlu0 %v817, 96
    %v823 = vpop.permute.xlu0 %822
    %v826 = vmul.f32 %v792, %v821
    %v827 = vmul.f32 %v807, %v823
    %v830 = vrot.slane %v827, 7
    %v831 = vsel %vm136, %v830, %v826
    %v833 = vadd.f32 %v734, %v831
    %v835 = vrot.slane %v833, 1
    %837 = vst.msk [vmem:[%s3 + $0x7] sm:$0x1] %vm143, %v833
    %838 = vst.msk [vmem:[%s3 + $0xf] sm:$0x1] %vm143, %v835
    %vm839 = vcmask 254976
    %840 = vst.msk [vmem:[#allocation2] sm:$0x3] %vm839, %v833
    // Predicated region
    $region22: #{mingru_layer.3} parent=1 // pred_check
      _
    $region23: #{mingru_layer.3} parent=1 // pred_check_branch
      %842 = sbr.rel (0) target = $region25
    $region24: #{mingru_layer.3} parent=1 // pred_region
      _
    $region25: #{mingru_layer.3} parent=1 // pred_fallthru
      _
    // Predicated region
    $region26: #{mingru_layer.3} parent=1 // pred_check
      _
    $region27: #{mingru_layer.3} parent=1 // pred_check_branch
      %844 = sbr.rel (0) target = $region29
    $region28: #{mingru_layer.3} parent=1 // pred_region
      _
    $region29: #{mingru_layer.3} parent=1 // pred_fallthru
      _
    %845 = vsyncpa [#allocation4], 1

</llo_original>
